<compile_context>
chip_gen: v5e
topology: v5e:2x2
jax: 0.10.0
libtpu: 0.0.40
codegen_flags: <defaults>
</compile_context>

<pallas_src>
import functools
import math

import jax
import jax.numpy as jnp
import numpy as np
from jax.experimental import pallas as pl
from jax.experimental.pallas import tpu as pltpu


def _label_smoothing_kernel(x_ref, t_ref, sum_ref, cnt_ref, sum_acc, cnt_acc, *,
                            padding_idx: int, smoothing: float,
                            vocab_size: int, n_rows: int, row_tile: int,
                            steps_per_core: int):
    c = pl.program_id(0)
    i = pl.program_id(1)

    # Per-core accumulators live in VMEM scratch; init on first inner step.
    @pl.when(i == 0)
    def _():
        sum_acc[...] = jnp.zeros_like(sum_acc)
        cnt_acc[...] = jnp.zeros_like(cnt_acc)

    xf = x_ref[...].astype(jnp.float32)             # (TM, V) upcast on-chip
    t = t_ref[...]                                  # (TM, 1) int32
    TM, V = xf.shape

    # Global-row validity: masks the ragged tail of the last real block and
    # any clamped duplicate steps (unclamped gstep beyond the data).
    gstep = c * steps_per_core + i
    row_base = gstep * row_tile
    rows = row_base + jax.lax.broadcasted_iota(jnp.int32, (TM, 1), 0)
    in_range = rows < n_rows                        # (TM, 1) bool

    ignore = t == padding_idx                       # (TM, 1) bool
    valid = jnp.logical_and(in_range, jnp.logical_not(ignore))
    target = jnp.where(ignore, 0, t)                # masked_fill(ignore, 0)

    # log-softmax statistics over the vocab (lane) axis, keeping only one
    # retained (TM, V) f32 tensor (xf); (xf - m) exists only inside exp.
    m = jnp.max(xf, axis=-1, keepdims=True)                         # (TM, 1)
    sum_x = jnp.sum(xf, axis=-1, keepdims=True)                     # (TM, 1)
    cols = jax.lax.broadcasted_iota(jnp.int32, (TM, V), 1)
    x_tgt = jnp.sum(jnp.where(cols == target, xf, 0.0),
                    axis=-1, keepdims=True)                         # (TM, 1)
    lse = jnp.log(jnp.sum(jnp.exp(xf - m), axis=-1, keepdims=True)) # (TM, 1)

    low = smoothing / (vocab_size - 1)
    conf = 1.0 - smoothing

    # sum_v true_dist * log(true_dist) is a compile-time constant
    # (xlogy convention: 0 * log(0) == 0 covers smoothing == 0 / == 1).
    ent = 0.0
    if conf > 0.0:
        ent += conf * math.log(conf)
    if low > 0.0:
        ent += (vocab_size - 1) * low * math.log(low)

    sum_logp = (sum_x - V * m) - V * lse            # sum_v logp
    logp_tgt = (x_tgt - m) - lse                    # logp[target]

    # row KL = ent - sum_v true_dist * logp
    #        = ent - (low * sum_logp + (conf - low) * logp_tgt)
    row_kl = ent - (low * sum_logp + (conf - low) * logp_tgt)        # (TM, 1)
    row_kl = jnp.where(valid, row_kl, 0.0)          # where, so NaN can't leak
    row_cnt = jnp.where(valid, 1.0, 0.0)

    sum_acc[...] += jnp.sum(row_kl).reshape(1, 1)
    cnt_acc[...] += jnp.sum(row_cnt).reshape(1, 1)

    # Single writeback of the tiny per-core output block.
    @pl.when(i == steps_per_core - 1)
    def _():
        sum_ref[...] = sum_acc[...].reshape(1, 1, 1)
        cnt_ref[...] = cnt_acc[...].reshape(1, 1, 1)


def _vmem_capacity_bytes():
    try:
        return int(pltpu.get_tpu_info().vmem_capacity_bytes)
    except Exception:
        return 64 * 1024 * 1024  # conservative (v7x-class) fallback


def _detect_num_tensorcores():
    """2 TensorCores per jax device on v4 / v5p / 7x; 1 on v5e/v6e/unknown."""
    try:
        kind = jax.devices()[0].device_kind.lower()
    except Exception:
        return 1
    if ("v4" in kind) or ("v5p" in kind) or ("7" in kind):
        return 2
    return 1


def label_smoothing_loss(predictions, targets, *, vocab_size, padding_idx,
                         smoothing, normalize_length=False,
                         row_tile=None, num_cores=None,
                         vmem_limit_bytes=None):
    """predictions: (B, S, V) float (any dtype); targets: (B, S) int.

    Returns the scalar label-smoothing loss matching the PyTorch module.
    """
    B, S, V = predictions.shape
    assert V == vocab_size
    assert vocab_size > 1, "vocab_size must be > 1 (smoothing / (V - 1))"
    N = B * S

    # Native dtype straight into the kernel: no extra HBM copies of x at all.
    x = predictions.reshape(N, V)
    y = targets.reshape(N, 1).astype(jnp.int32)

    dtype_bytes = jnp.dtype(x.dtype).itemsize
    sublane_mult = max(8, 32 // dtype_bytes)   # 8 f32, 16 bf16, 32 int8/fp8

    if num_cores is None:
        num_cores = _detect_num_tensorcores()
    num_cores = max(1, int(num_cores))

    # Generation-aware VMEM budget: ~48 MiB on 64-MiB-VMEM chips (v7x-class),
    # ~96 MiB on 128-MiB-VMEM chips (v5e/v6e).
    if vmem_limit_bytes is None:
        cap = _vmem_capacity_bytes()
        vmem_limit_bytes = (48 << 20) if cap <= (64 << 20) else (96 << 20)
    vmem_limit_bytes = int(vmem_limit_bytes)

    # Row tile sized against the VMEM budget, counting BOTH the double-buffered
    # native-dtype input tile and ~3 live (TM, V) f32 intermediates.
    if row_tile is None:
        bytes_per_row = 2 * V * dtype_bytes + 3 * V * 4 + 16
        tm = int(0.7 * vmem_limit_bytes) // bytes_per_row
        tm = min(tm, 8192)
    else:
        tm = int(row_tile)
    rows_per_core = int(pl.cdiv(N, num_cores))
    tm = min(tm, sublane_mult * int(pl.cdiv(rows_per_core, sublane_mult)))
    tm = max(sublane_mult, (tm // sublane_mult) * sublane_mult)

    total_steps = int(pl.cdiv(N, tm))                # blocks actually in x
    steps_per_core = int(pl.cdiv(total_steps, num_cores))
    last_block = total_steps - 1
    # Only clamp the block index when the rectangular grid overshoots the
    # real block count (multi-core, non-divisible); overshoot steps are fully
    # masked in-kernel via the global-row-index check.
    if num_cores * steps_per_core > total_steps:
        def row_map(c, i):
            return (jnp.minimum(c * steps_per_core + i, last_block), 0)
    else:
        def row_map(c, i):
            return (c * steps_per_core + i, 0)

    kernel = functools.partial(_label_smoothing_kernel,
                               padding_idx=padding_idx,
                               smoothing=smoothing,
                               vocab_size=vocab_size,
                               n_rows=N,
                               row_tile=tm,
                               steps_per_core=steps_per_core)

    cost = pl.CostEstimate(
        flops=int(7 * N * V),
        transcendentals=int(N * V),
        bytes_accessed=int(N * V * dtype_bytes + 4 * N + 8 * num_cores))

    def run(dim_sems):
        return pl.pallas_call(
            kernel,
            out_shape=(jax.ShapeDtypeStruct((num_cores, 1, 1), jnp.float32),
                       jax.ShapeDtypeStruct((num_cores, 1, 1), jnp.float32)),
            grid_spec=pltpu.PrefetchScalarGridSpec(
                num_scalar_prefetch=0,
                grid=(num_cores, steps_per_core),
                in_specs=[
                    pl.BlockSpec((tm, V), row_map),
                    pl.BlockSpec((tm, 1), row_map),
                ],
                out_specs=(pl.BlockSpec((1, 1, 1), lambda c, i: (c, 0, 0)),
                           pl.BlockSpec((1, 1, 1), lambda c, i: (c, 0, 0))),
                scratch_shapes=[pltpu.VMEM((1, 1), jnp.float32),
                                pltpu.VMEM((1, 1), jnp.float32)]),
            compiler_params=pltpu.CompilerParams(
                dimension_semantics=dim_sems,
                vmem_limit_bytes=vmem_limit_bytes),
            cost_estimate=cost,
        )(x, y)

    if num_cores > 1:
        # CORE_PARALLEL actually splits the leading axis across TensorCores
        # on 2-TC chips; fall back to "parallel" if the chip rejects it.
        try:
            sums, cnts = run((pltpu.CORE_PARALLEL, pltpu.ARBITRARY))
        except Exception:
            sums, cnts = run(("parallel", "arbitrary"))
    else:
        sums, cnts = run(("arbitrary", "arbitrary"))

    total_sum = jnp.sum(sums)
    total_cnt = jnp.sum(cnts)
    denom = total_cnt if normalize_length else jnp.float32(B)
    return total_sum / denom


def _reference_loss(predictions, targets, *, vocab_size, padding_idx,
                    smoothing, normalize_length=False):
    """Pure-JAX reference mirroring the PyTorch module."""
    B, S, V = predictions.shape
    x = predictions.reshape(-1, V).astype(jnp.float32)
    y = targets.reshape(-1).astype(jnp.int32)
    low = smoothing / (vocab_size - 1)
    conf = 1.0 - smoothing
    ignore = y == padding_idx
    total = y.shape[0] - jnp.sum(ignore)
    tgt = jnp.where(ignore, 0, y)
    true_dist = jnp.full_like(x, low).at[jnp.arange(x.shape[0]), tgt].set(conf)
    logp = jax.nn.log_softmax(x, axis=1)
    kl = true_dist * (jnp.where(true_dist > 0, jnp.log(true_dist), 0.0) - logp)
    kl = jnp.where(ignore[:, None], 0.0, kl)
    denom = total if normalize_length else B
    return jnp.sum(kl) / denom


if __name__ == "__main__":
    key = jax.random.PRNGKey(0)
    padding_idx = 0
    smoothing = 0.1

    # Case 1: even shapes, f32, normalize by batch.
    B, S, V = 2, 8, 32
    k1, k2 = jax.random.split(key)
    predictions = jax.random.normal(k1, (B, S, V), dtype=jnp.float32)
    targets = jax.random.randint(k2, (B, S), 0, V, dtype=jnp.int32)
    targets = targets.at[0, -2:].set(padding_idx)
    targets = targets.at[1, -1].set(padding_idx)

    loss = label_smoothing_loss(
        predictions, targets, vocab_size=V, padding_idx=padding_idx,
        smoothing=smoothing, normalize_length=False)
    loss = jax.block_until_ready(loss)
    ref = _reference_loss(
        predictions, targets, vocab_size=V, padding_idx=padding_idx,
        smoothing=smoothing, normalize_length=False)
    np.testing.assert_allclose(np.asarray(loss), np.asarray(ref),
                               rtol=1e-5, atol=1e-5)

    # Case 2: ragged N (partial edge block, no x pad), normalize by tokens.
    B2, S2, V2 = 3, 5, 40
    k3, k4 = jax.random.split(k2)
    preds2 = jax.random.normal(k3, (B2, S2, V2), dtype=jnp.float32)
    tgts2 = jax.random.randint(k4, (B2, S2), 0, V2, dtype=jnp.int32)
    tgts2 = tgts2.at[2, -3:].set(padding_idx)

    loss2 = label_smoothing_loss(
        preds2, tgts2, vocab_size=V2, padding_idx=padding_idx,
        smoothing=smoothing, normalize_length=True)
    loss2 = jax.block_until_ready(loss2)
    ref2 = _reference_loss(
        preds2, tgts2, vocab_size=V2, padding_idx=padding_idx,
        smoothing=smoothing, normalize_length=True)
    np.testing.assert_allclose(np.asarray(loss2), np.asarray(ref2),
                               rtol=1e-5, atol=1e-5)

    # Case 3: bf16 predictions fed natively (no wrapper f32 copy),
    # exercises the 16-row sublane alignment.
    preds_bf16 = predictions.astype(jnp.bfloat16)
    loss3 = label_smoothing_loss(
        preds_bf16, targets, vocab_size=V, padding_idx=padding_idx,
        smoothing=smoothing, normalize_length=False)
    loss3 = jax.block_until_ready(loss3)
    ref3 = _reference_loss(
        preds_bf16, targets, vocab_size=V, padding_idx=padding_idx,
        smoothing=smoothing, normalize_length=False)
    np.testing.assert_allclose(np.asarray(loss3), np.asarray(ref3),
                               rtol=1e-4, atol=1e-4)

    # Case 4: small explicit row_tile forces multiple reduction steps
    # (exercises scratch accumulation + single last-step writeback).
    loss4 = label_smoothing_loss(
        predictions, targets, vocab_size=V, padding_idx=padding_idx,
        smoothing=smoothing, normalize_length=True, row_tile=8, num_cores=1)
    loss4 = jax.block_until_ready(loss4)
    ref4 = _reference_loss(
        predictions, targets, vocab_size=V, padding_idx=padding_idx,
        smoothing=smoothing, normalize_length=True)
    np.testing.assert_allclose(np.asarray(loss4), np.asarray(ref4),
                               rtol=1e-5, atol=1e-5)

    print("KERNEL_OK")
</pallas_src>

<mosaic_0001>
module attributes {stable_mosaic.version = 11 : i64} {
  func.func @_label_smoothing_kernel(%arg0: i32, %arg1: i32, %arg2: memref<16x32xf32, #tpu.memory_space<vmem>>, %arg3: memref<16x1xi32, #tpu.memory_space<vmem>>, %arg4: memref<1x1x1xf32, #tpu.memory_space<vmem>>, %arg5: memref<1x1x1xf32, #tpu.memory_space<vmem>>, %arg6: memref<1x1xf32, #tpu.memory_space<vmem>>, %arg7: memref<1x1xf32, #tpu.memory_space<vmem>>) attributes {dimension_semantics = [#tpu.dimension_semantics<arbitrary>, #tpu.dimension_semantics<arbitrary>], iteration_bounds = array<i64: 1, 1>, scalar_prefetch = 0 : i64, scratch_operands = 2 : i64, tpu.core_type = #tpu.core_type<tc>, window_params = [{transform_indices = @transform_0, window_bounds = array<i64: 16, 32>}, {transform_indices = @transform_1, window_bounds = array<i64: 16, 1>}, {transform_indices = @transform_2, window_bounds = array<i64: 1, 1, 1>}, {transform_indices = @transform_3, window_bounds = array<i64: 1, 1, 1>}]} {
    %c0_i32 = arith.constant 0 : i32
    %0 = arith.cmpi eq, %arg1, %c0_i32 : i32
    %1 = arith.extui %0 : i1 to i32
    %c0_i32_0 = arith.constant 0 : i32
    %2 = arith.cmpi ne, %1, %c0_i32_0 : i32
    scf.if %2 {
      %cst_32 = arith.constant 0.000000e+00 : f32
      %75 = vector.broadcast %cst_32 : f32 to vector<1x1xf32>
      %c0_33 = arith.constant 0 : index
      %c0_34 = arith.constant 0 : index
      %76 = vector.load %arg6[%c0_33, %c0_34] : memref<1x1xf32, #tpu.memory_space<vmem>>, vector<1x1xf32>
      tpu.vector_store %arg6[%c0_33, %c0_34], %75 {strides = array<i32>} : memref<1x1xf32, #tpu.memory_space<vmem>>, vector<1x1xf32>,
      %cst_35 = arith.constant 0.000000e+00 : f32
      %77 = vector.broadcast %cst_35 : f32 to vector<1x1xf32>
      %c0_36 = arith.constant 0 : index
      %c0_37 = arith.constant 0 : index
      %78 = vector.load %arg7[%c0_36, %c0_37] : memref<1x1xf32, #tpu.memory_space<vmem>>, vector<1x1xf32>
      tpu.vector_store %arg7[%c0_36, %c0_37], %77 {strides = array<i32>} : memref<1x1xf32, #tpu.memory_space<vmem>>, vector<1x1xf32>,
    } else {
    }
    %c0 = arith.constant 0 : index
    %c0_1 = arith.constant 0 : index
    %3 = vector.load %arg2[%c0, %c0_1] : memref<16x32xf32, #tpu.memory_space<vmem>>, vector<16x32xf32>
    %c0_2 = arith.constant 0 : index
    %c0_3 = arith.constant 0 : index
    %4 = vector.load %arg3[%c0_2, %c0_3] : memref<16x1xi32, #tpu.memory_space<vmem>>, vector<16x1xi32>
    %c1_i32 = arith.constant 1 : i32
    %5 = arith.muli %arg0, %c1_i32 : i32
    %6 = arith.addi %5, %arg1 : i32
    %c16_i32 = arith.constant 16 : i32
    %7 = arith.muli %6, %c16_i32 : i32
    %8 = tpu.iota {dimensions = array<i32: 0>} : vector<16x1xi32>
    %9 = vector.broadcast %7 : i32 to vector<16x1xi32>
    %10 = arith.addi %9, %8 : vector<16x1xi32>
    %c16_i32_4 = arith.constant 16 : i32
    %11 = vector.broadcast %c16_i32_4 : i32 to vector<16x1xi32>
    %12 = arith.cmpi slt, %10, %11 : vector<16x1xi32>
    %c0_i32_5 = arith.constant 0 : i32
    %13 = vector.broadcast %c0_i32_5 : i32 to vector<16x1xi32>
    %14 = arith.cmpi eq, %4, %13 : vector<16x1xi32>
    %cst = arith.constant dense<true> : vector<16x1xi1>
    %15 = arith.xori %14, %cst : vector<16x1xi1>
    %16 = arith.andi %12, %15 : vector<16x1xi1>
    %c0_i32_6 = arith.constant 0 : i32
    %17 = vector.broadcast %c0_i32_6 : i32 to vector<16x1xi32>
    %18 = arith.select %14, %17, %4 : vector<16x1xi1>, vector<16x1xi32>
    %cst_7 = arith.constant dense<0xFF800000> : vector<16xf32>
    %19 = vector.multi_reduction <maximumf>, %3, %cst_7 [1] : vector<16x32xf32> to vector<16xf32>
    %20 = vector.shape_cast %19 : vector<16xf32> to vector<16x1xf32>
    %cst_8 = arith.constant dense<0.000000e+00> : vector<16xf32>
    %21 = vector.multi_reduction <add>, %3, %cst_8 [1] : vector<16x32xf32> to vector<16xf32>
    %22 = vector.shape_cast %21 : vector<16xf32> to vector<16x1xf32>
    %23 = tpu.iota {dimensions = array<i32: 1>} : vector<16x32xi32>
    %24 = vector.broadcast %18 : vector<16x1xi32> to vector<16x32xi32>
    %25 = arith.cmpi eq, %23, %24 : vector<16x32xi32>
    %cst_9 = arith.constant 0.000000e+00 : f32
    %26 = vector.broadcast %cst_9 : f32 to vector<16x32xf32>
    %27 = arith.select %25, %3, %26 : vector<16x32xi1>, vector<16x32xf32>
    %cst_10 = arith.constant dense<0.000000e+00> : vector<16xf32>
    %28 = vector.multi_reduction <add>, %27, %cst_10 [1] : vector<16x32xf32> to vector<16xf32>
    %29 = vector.shape_cast %28 : vector<16xf32> to vector<16x1xf32>
    %30 = vector.broadcast %20 : vector<16x1xf32> to vector<16x32xf32>
    %31 = arith.subf %3, %30 : vector<16x32xf32>
    %32 = math.exp %31 : vector<16x32xf32>
    %cst_11 = arith.constant dense<0.000000e+00> : vector<16xf32>
    %33 = vector.multi_reduction <add>, %32, %cst_11 [1] : vector<16x32xf32> to vector<16xf32>
    %34 = vector.shape_cast %33 : vector<16xf32> to vector<16x1xf32>
    %35 = math.log %34 : vector<16x1xf32>
    %cst_12 = arith.constant 3.200000e+01 : f32
    %36 = vector.broadcast %cst_12 : f32 to vector<16x1xf32>
    %37 = arith.mulf %36, %20 : vector<16x1xf32>
    %38 = arith.subf %22, %37 : vector<16x1xf32>
    %cst_13 = arith.constant 3.200000e+01 : f32
    %39 = vector.broadcast %cst_13 : f32 to vector<16x1xf32>
    %40 = arith.mulf %39, %35 : vector<16x1xf32>
    %41 = arith.subf %38, %40 : vector<16x1xf32>
    %42 = arith.subf %29, %20 : vector<16x1xf32>
    %43 = arith.subf %42, %35 : vector<16x1xf32>
    %cst_14 = arith.constant 0.0032258064 : f32
    %44 = vector.broadcast %cst_14 : f32 to vector<16x1xf32>
    %45 = arith.mulf %44, %41 : vector<16x1xf32>
    %cst_15 = arith.constant 0.896774172 : f32
    %46 = vector.broadcast %cst_15 : f32 to vector<16x1xf32>
    %47 = arith.mulf %46, %43 : vector<16x1xf32>
    %48 = arith.addf %45, %47 : vector<16x1xf32>
    %cst_16 = arith.constant -0.668481708 : f32
    %49 = vector.broadcast %cst_16 : f32 to vector<16x1xf32>
    %50 = arith.subf %49, %48 : vector<16x1xf32>
    %cst_17 = arith.constant 0.000000e+00 : f32
    %51 = vector.broadcast %cst_17 : f32 to vector<16x1xf32>
    %52 = arith.select %16, %50, %51 : vector<16x1xi1>, vector<16x1xf32>
    %cst_18 = arith.constant 1.000000e+00 : f32
    %cst_19 = arith.constant 0.000000e+00 : f32
    %53 = vector.broadcast %cst_18 : f32 to vector<16x1xf32>
    %54 = vector.broadcast %cst_19 : f32 to vector<16x1xf32>
    %55 = arith.select %16, %53, %54 : vector<16x1xi1>, vector<16x1xf32>
    %c0_20 = arith.constant 0 : index
    %c0_21 = arith.constant 0 : index
    %56 = vector.load %arg6[%c0_20, %c0_21] : memref<1x1xf32, #tpu.memory_space<vmem>>, vector<1x1xf32>
    %57 = vector.shape_cast %52 : vector<16x1xf32> to vector<1x16x1xf32>
    %cst_22 = arith.constant dense<0.000000e+00> : vector<1xf32>
    %58 = vector.multi_reduction <add>, %57, %cst_22 [1, 2] : vector<1x16x1xf32> to vector<1xf32>
    %59 = vector.shape_cast %58 : vector<1xf32> to vector<1x1x1xf32>
    %60 = vector.extract %59[0, 0, 0] : f32 from vector<1x1x1xf32>
    %61 = vector.broadcast %60 : f32 to vector<1x1xf32>
    %62 = arith.addf %56, %61 : vector<1x1xf32>
    %c0_23 = arith.constant 0 : index
    %c0_24 = arith.constant 0 : index
    %63 = vector.load %arg6[%c0_23, %c0_24] : memref<1x1xf32, #tpu.memory_space<vmem>>, vector<1x1xf32>
    tpu.vector_store %arg6[%c0_23, %c0_24], %62 {strides = array<i32>} : memref<1x1xf32, #tpu.memory_space<vmem>>, vector<1x1xf32>,
    %c0_25 = arith.constant 0 : index
    %c0_26 = arith.constant 0 : index
    %64 = vector.load %arg7[%c0_25, %c0_26] : memref<1x1xf32, #tpu.memory_space<vmem>>, vector<1x1xf32>
    %65 = vector.shape_cast %55 : vector<16x1xf32> to vector<1x16x1xf32>
    %cst_27 = arith.constant dense<0.000000e+00> : vector<1xf32>
    %66 = vector.multi_reduction <add>, %65, %cst_27 [1, 2] : vector<1x16x1xf32> to vector<1xf32>
    %67 = vector.shape_cast %66 : vector<1xf32> to vector<1x1x1xf32>
    %68 = vector.extract %67[0, 0, 0] : f32 from vector<1x1x1xf32>
    %69 = vector.broadcast %68 : f32 to vector<1x1xf32>
    %70 = arith.addf %64, %69 : vector<1x1xf32>
    %c0_28 = arith.constant 0 : index
    %c0_29 = arith.constant 0 : index
    %71 = vector.load %arg7[%c0_28, %c0_29] : memref<1x1xf32, #tpu.memory_space<vmem>>, vector<1x1xf32>
    tpu.vector_store %arg7[%c0_28, %c0_29], %70 {strides = array<i32>} : memref<1x1xf32, #tpu.memory_space<vmem>>, vector<1x1xf32>,
    %c0_i32_30 = arith.constant 0 : i32
    %72 = arith.cmpi eq, %arg1, %c0_i32_30 : i32
    %73 = arith.extui %72 : i1 to i32
    %c0_i32_31 = arith.constant 0 : i32
    %74 = arith.cmpi ne, %73, %c0_i32_31 : i32
    scf.if %74 {
      %c0_32 = arith.constant 0 : index
      %c0_33 = arith.constant 0 : index
      %75 = vector.load %arg6[%c0_32, %c0_33] : memref<1x1xf32, #tpu.memory_space<vmem>>, vector<1x1xf32>
      %76 = vector.shape_cast %75 : vector<1x1xf32> to vector<1x1x1xf32>
      %c0_34 = arith.constant 0 : index
      %c0_35 = arith.constant 0 : index
      %c0_36 = arith.constant 0 : index
      %77 = vector.load %arg4[%c0_34, %c0_35, %c0_36] : memref<1x1x1xf32, #tpu.memory_space<vmem>>, vector<1x1x1xf32>
      tpu.vector_store %arg4[%c0_34, %c0_35, %c0_36], %76 {strides = array<i32>} : memref<1x1x1xf32, #tpu.memory_space<vmem>>, vector<1x1x1xf32>,
      %c0_37 = arith.constant 0 : index
      %c0_38 = arith.constant 0 : index
      %78 = vector.load %arg7[%c0_37, %c0_38] : memref<1x1xf32, #tpu.memory_space<vmem>>, vector<1x1xf32>
      %79 = vector.shape_cast %78 : vector<1x1xf32> to vector<1x1x1xf32>
      %c0_39 = arith.constant 0 : index
      %c0_40 = arith.constant 0 : index
      %c0_41 = arith.constant 0 : index
      %80 = vector.load %arg5[%c0_39, %c0_40, %c0_41] : memref<1x1x1xf32, #tpu.memory_space<vmem>>, vector<1x1x1xf32>
      tpu.vector_store %arg5[%c0_39, %c0_40, %c0_41], %79 {strides = array<i32>} : memref<1x1x1xf32, #tpu.memory_space<vmem>>, vector<1x1x1xf32>,
    } else {
    }
    return
  }
  func.func @transform_0(%arg0: i32, %arg1: i32) -> (i32, i32) {
    %c1_i32 = arith.constant 1 : i32
    %0 = arith.muli %arg0, %c1_i32 : i32
    %1 = arith.addi %0, %arg1 : i32
    %c0_i32 = arith.constant 0 : i32
    %c0_i32_0 = arith.constant 0 : i32
    return %1, %c0_i32 : i32, i32
  }
  func.func @transform_1(%arg0: i32, %arg1: i32) -> (i32, i32) {
    %c1_i32 = arith.constant 1 : i32
    %0 = arith.muli %arg0, %c1_i32 : i32
    %1 = arith.addi %0, %arg1 : i32
    %c0_i32 = arith.constant 0 : i32
    %c0_i32_0 = arith.constant 0 : i32
    return %1, %c0_i32 : i32, i32
  }
  func.func @transform_2(%arg0: i32, %arg1: i32) -> (i32, i32, i32) {
    %c0_i32 = arith.constant 0 : i32
    %c0_i32_0 = arith.constant 0 : i32
    %c0_i32_1 = arith.constant 0 : i32
    return %arg0, %c0_i32, %c0_i32_0 : i32, i32, i32
  }
  func.func @transform_3(%arg0: i32, %arg1: i32) -> (i32, i32, i32) {
    %c0_i32 = arith.constant 0 : i32
    %c0_i32_0 = arith.constant 0 : i32
    %c0_i32_1 = arith.constant 0 : i32
    return %arg0, %c0_i32, %c0_i32_0 : i32, i32, i32
  }
}

</mosaic_0001>

<llo_original>
// kernel: tpu_custom_call.1
$region0: #{tpu_custom_call.1}
  #allocation0 [shape = 'u32[]', space=smem, size = 0x4, offset = 0x4, fixed_abs, tag = 'smem constant byte address 0x4 - core index']
  #allocation1 [shape = 'u32[72,128]{1,0:T(1,128)}', space=vmem, size = 0x9000, scoped, tag = 'internal scratch']
  #allocation2 [shape = 'f32[1,1]{1,0:T(1,128)}', space=vmem, size = 0x200, scoped, tag = 'scratch operand']
  #allocation3 [shape = 'f32[1,1]{1,0:T(1,128)}', space=vmem, size = 0x200, scoped, tag = 'scratch operand']
  %s0 = inlined_call_operand.vmem [shape: f32[16,32], index: 0, kind: input, shape index: {}]
  %s1 = inlined_call_operand.vmem [shape: s32[16,1], index: 1, kind: input, shape index: {}]
  %s2 = inlined_call_operand.hbm [shape: f32[1,1,1], index: 2, kind: output, shape index: {0}]
  %s3 = inlined_call_operand.hbm [shape: f32[1,1,1], index: 3, kind: output, shape index: {1}]
  %4 = xla_tuple %s2, %s3
  %s5 = sld [smem:[#allocation0]]
  $region34: #{tpu_custom_call.1} parent=0
    _
  %s7 = ssub.s32 1, %s5
  %s8 = scalar_select 0, %s7, %s5
  $region1: #{tpu_custom_call.1} parent=0
    #allocation4 [shape = 'u8[512]{0}', space=vmem, size = 0x400, scoped, tag = 'output window, operand 0, single buffered']
    #allocation5 [shape = 's32[1]{0}', space=sflag, size = 0x4, scoped, tag = 'scoped memory for tpu_custom_call.1']
    #allocation6 [shape = 'u8[512]{0}', space=vmem, size = 0x400, scoped, tag = 'output window, operand 1, single buffered']
    #allocation7 [shape = 's32[1]{0}', space=sflag, size = 0x4, scoped, tag = 'scoped memory for tpu_custom_call.1']
    %9 = vsyncpa [#allocation5], 0
    %10 = vsyncpa [#allocation7], 0
    // Predicated region
    $region2: #{tpu_custom_call.1} parent=1 // pred_check
      _
    $region3: #{tpu_custom_call.1} parent=1 // pred_check_branch
      %12 = sbr.rel (0) target = $region5
    $region4: #{tpu_custom_call.1} parent=1 // pred_region
      %s13 = sadd.s32 0, 0
      %s14 = smul.u32 2, %s13
      %p15 = scmp.lt.s32.totalorder %s14, 1
      %s16 = scalar_select %p15, %s14, 1
      %s17 = smul.addr %s16, 8
      %s18 = scalar_lea.vmem %s0, %s17
      %s19 = sadd.s32 0, 0
      %s20 = smul.u32 2, %s19
    $region5: #{tpu_custom_call.1} parent=1 // pred_fallthru
      _
    // Predicated region
    $region6: #{tpu_custom_call.1} parent=1 // pred_check
      _
    $region7: #{tpu_custom_call.1} parent=1 // pred_check_branch
      %22 = sbr.rel (0) target = $region9
    $region8: #{tpu_custom_call.1} parent=1 // pred_region
      %s23 = sadd.s32 0, 0
      %s24 = smul.u32 2, %s23
      %p25 = scmp.lt.s32.totalorder %s24, 1
      %s26 = scalar_select %p25, %s24, 1
      %s27 = smul.addr %s26, 8
      %s28 = scalar_lea.vmem %s1, %s27
      %s29 = sadd.s32 0, 0
      %s30 = smul.u32 2, %s29
    $region9: #{tpu_custom_call.1} parent=1 // pred_fallthru
      _
    %s31 = sadd.s32 0, 0
    %s32 = smul.u32 2, %s31
    %p33 = scmp.lt.s32.totalorder %s32, 1
    %s34 = scalar_select %p33, %s32, 1
    %s35 = smul.addr %s34, 8
    %s36 = scalar_lea.vmem %s0, %s35
    %s37 = sadd.s32 0, 0
    %s38 = smul.u32 2, %s37
    %p39 = scmp.lt.s32.totalorder %s38, 1
    %s40 = scalar_select %p39, %s38, 1
    %s41 = smul.addr %s40, 8
    %s42 = scalar_lea.vmem %s1, %s41
    %s43 = sadd.s32 0, 0
    %s44 = smul.u32 2, %s43
    %p45 = scmp.lt.s32.totalorder %s44, 1
    %s46 = scalar_select %p45, %s44, 1
    %s47 = smul.addr %s46, 8
    %s48 = scalar_lea.vmem %s0, %s47
    %s49 = sadd.s32 0, 0
    %s50 = smul.u32 2, %s49
    %s51 = sadd.s32 0, 0
    %s52 = smul.u32 2, %s51
    %p53 = scmp.lt.s32.totalorder %s52, 1
    %s54 = scalar_select %p53, %s52, 1
    %s55 = smul.addr %s54, 8
    %s56 = scalar_lea.vmem %s1, %s55
    %s57 = sadd.s32 0, 0
    %s58 = smul.u32 2, %s57
    %p59 = scmp.eq.s32.totalorder 0, 0
    // Predicated region
    $region10: #{tpu_custom_call.1} parent=1 // pred_check
      %p60 = pneg %p59
    $region11: #{tpu_custom_call.1} parent=1 // pred_check_branch
      %62 = sbr.rel (%p60) target = $region13
    $region12: #{tpu_custom_call.1} parent=1 // pred_region
      %vm63 = vcmask 0
      %64 = vst.msk [vmem:[#allocation2] sm:$0x1] %vm63, 0.0
      %65 = vst.msk [vmem:[#allocation3] sm:$0x1] %vm63, 0.0
    $region13: #{tpu_custom_call.1} parent=1 // pred_fallthru
      _
    %v66 = vld [vmem:[%s48] sm:$0xff]
    %v67 = vld [vmem:[%s48 + $0x8] sm:$0xff]
    %v68 = vld [vmem:[%s56] sm:$0xff]
    %v69 = vld [vmem:[%s56 + $0x8] sm:$0xff]
    %s70 = sadd.s32 0, 0
    %s71 = smul.u32 %s70, 16
    %v72 = vlaneseq
    %v73 = vshrl.u32 %v72, 7
    %v74 = vadd.s32 %v73, 8
    %v75 = vstv %s71
    %v76 = vadd.s32 %v75, %v73
    %v77 = vadd.s32 %v75, %v74
    %vm78 = vcmp.lt.s32.totalorder %v76, 16
    %vm79 = vcmp.lt.s32.totalorder %v77, 16
    %vm80 = vcmp.eq.s32.totalorder %v68, 0
    %vm81 = vcmp.eq.s32.totalorder %v69, 0
    %vm82 = vmxor %vm80, 1
    %vm83 = vmxor %vm81, 1
    %vm84 = vmand %vm78, %vm82
    %vm85 = vmand %vm79, %vm83
    %vm86 = vcmask 261120
    %v87 = vsel %vm86, %v66, -inf
    %88 = vmax.xlane.f32.xlu0 %v87
    %v89 = vpop.xlane.xlu0 %88
    %v90 = vsel %vm86, %v67, -inf
    %91 = vmax.xlane.f32.xlu0 %v90
    %v92 = vpop.xlane.xlu0 %91
    %v93 = vsel %vm86, %v66, 0.0
    %94 = vadd.xlane.f32.xlu0 %v93
    %v95 = vpop.xlane.xlu0 %94
    %v96 = vsel %vm86, %v67, 0.0
    %97 = vadd.xlane.f32.xlu0 %v96
    %v98 = vpop.xlane.xlu0 %97
    %v99 = vlaneseq
    %v100 = vand.u32 %v99, 127
    %101 = vset.pattern.permute.xlu0 0
    %102 = vperm.xlu0 %101, %v68
    %v103 = vpop.permute.xlu0 %102
    %104 = vset.pattern.permute.xlu0 0
    %105 = vperm.xlu0 %104, %v69
    %v106 = vpop.permute.xlu0 %105
    %vm107 = vcmp.eq.s32.totalorder %v100, %v103
    %vm108 = vcmp.eq.s32.totalorder %v100, %v106
    %v109 = vsel %vm107, %v66, 0.0
    %v110 = vsel %vm108, %v67, 0.0
    %v111 = vsel %vm86, %v109, 0.0
    %112 = vadd.xlane.f32.xlu0 %v111
    %v113 = vpop.xlane.xlu0 %112
    %v114 = vsel %vm86, %v110, 0.0
    %115 = vadd.xlane.f32.xlu0 %v114
    %v116 = vpop.xlane.xlu0 %115
    %v117 = vsub.f32 %v66, %v89
    %v118 = vsub.f32 %v67, %v92
    %v119 = vmul.f32 %v117, 1.442695
    %v120 = vpow.pop %v119
    %v121 = vmul.f32 %v118, 1.442695
    %v122 = vpow.pop %v121
    %v123 = vsel %vm86, %v120, 0.0
    %124 = vadd.xlane.f32.xlu0 %v123
    %v125 = vpop.xlane.xlu0 %124
    %v126 = vsel %vm86, %v122, 0.0
    %127 = vadd.xlane.f32.xlu0 %v126
    %v128 = vpop.xlane.xlu0 %127
    %v129 = vlog2.pop %v125
    %v130 = vmul.f32 %v129, 0.6931472
    %v131 = vlog2.pop %v128
    %v132 = vmul.f32 %v131, 0.6931472
    %v133 = vmul.f32 %v89, 32.0
    %v134 = vmul.f32 %v92, 32.0
    %v135 = vsub.f32 %v95, %v133
    %v136 = vsub.f32 %v98, %v134
    %v137 = vmul.f32 %v130, 32.0
    %v138 = vmul.f32 %v132, 32.0
    %v139 = vsub.f32 %v135, %v137
    %v140 = vsub.f32 %v136, %v138
    %v141 = vsub.f32 %v113, %v89
    %v142 = vsub.f32 %v116, %v92
    %v143 = vsub.f32 %v141, %v130
    %v144 = vsub.f32 %v142, %v132
    %v145 = vmul.f32 %v139, 0.0032258064
    %v146 = vmul.f32 %v140, 0.0032258064
    %v147 = vmul.f32 %v143, 0.8967742
    %v148 = vmul.f32 %v144, 0.8967742
    %v149 = vadd.f32 %v145, %v147
    %v150 = vadd.f32 %v146, %v148
    %v151 = vsub.f32 -0.6684817, %v149
    %v152 = vsub.f32 -0.6684817, %v150
    %v153 = vsel %vm84, %v151, 0.0
    %v154 = vsel %vm85, %v152, 0.0
    %v155 = vsel %vm84, 1.0, 0.0
    %v156 = vsel %vm85, 1.0, 0.0
    %v157 = vld [vmem:[#allocation2] sm:$0x1]
    %vm158 = vcmask 7168
    %v159 = vsel %vm158, %v153, 0.0
    %v160 = vsel %vm158, %v154, 0.0
    %v161 = vadd.f32 %v159, %v160
    %162 = vadd.xlane.f32.xlu0 %v161
    %v163 = vpop.xlane.xlu0 %162
    %v164 = vrot.slane %v163, 4
    %v165 = vadd.f32 %v163, %v164
    %v166 = vrot.slane %v165, 2
    %v167 = vadd.f32 %v165, %v166
    %v168 = vrot.slane %v167, 1
    %v169 = vadd.f32 %v167, %v168
    %s170 = vtos %v169
    %v171 = vstv %s170
    %v172 = vadd.f32 %v157, %v171
    %vm173 = vcmask 0
    %174 = vst.msk [vmem:[#allocation2] sm:$0x1] %vm173, %v172
    %v175 = vld [vmem:[#allocation3] sm:$0x1]
    %v176 = vsel %vm158, %v155, 0.0
    %v177 = vsel %vm158, %v156, 0.0
    %v178 = vadd.f32 %v176, %v177
    %179 = vadd.xlane.f32.xlu0 %v178
    %v180 = vpop.xlane.xlu0 %179
    %v181 = vrot.slane %v180, 4
    %v182 = vadd.f32 %v180, %v181
    %v183 = vrot.slane %v182, 2
    %v184 = vadd.f32 %v182, %v183
    %v185 = vrot.slane %v184, 1
    %v186 = vadd.f32 %v184, %v185
    %s187 = vtos %v186
    %v188 = vstv %s187
    %v189 = vadd.f32 %v175, %v188
    %190 = vst.msk [vmem:[#allocation3] sm:$0x1] %vm173, %v189
    // Predicated region
    $region14: #{tpu_custom_call.1} parent=1 // pred_check
      %p191 = pneg %p59
    $region15: #{tpu_custom_call.1} parent=1 // pred_check_branch
      %193 = sbr.rel (%p191) target = $region17
    $region16: #{tpu_custom_call.1} parent=1 // pred_region
      %v194 = vld [vmem:[#allocation2] sm:$0x1]
      %195 = vst.msk [vmem:[#allocation4] sm:$0x1] %vm173, %v194
      %v196 = vld [vmem:[#allocation3] sm:$0x1]
      %197 = vst.msk [vmem:[#allocation6] sm:$0x1] %vm173, %v196
    $region17: #{tpu_custom_call.1} parent=1 // pred_fallthru
      _
    // Predicated region
    $region18: #{tpu_custom_call.1} parent=1 // pred_check
      _
    $region19: #{tpu_custom_call.1} parent=1 // pred_check_branch
      %199 = sbr.rel (0) target = $region21
    $region20: #{tpu_custom_call.1} parent=1 // pred_region
      %201 = vsyncadd [#allocation5], 0
      %s203 = sshll.u32 [#allocation4], 4
      %s204 = int_to_ptr.vmem [resolvable:$true] %s203
      %s205 = sshll.u32 %s2, 4
      %s206 = int_to_ptr.hbm [resolvable:$true] %s205
      %208 = dma.vmem_to_hbm [thread:$0]  %s204, 16, %s206, [#allocation5]
    $region21: #{tpu_custom_call.1} parent=1 // pred_fallthru
      _
    // Predicated region
    $region22: #{tpu_custom_call.1} parent=1 // pred_check
      _
    $region23: #{tpu_custom_call.1} parent=1 // pred_check_branch
      %210 = sbr.rel (0) target = $region25
    $region24: #{tpu_custom_call.1} parent=1 // pred_region
      %212 = vsyncadd [#allocation7], 0
      %s214 = sshll.u32 [#allocation6], 4
      %s215 = int_to_ptr.vmem [resolvable:$true] %s214
      %s216 = sshll.u32 %s3, 4
      %s217 = int_to_ptr.hbm [resolvable:$true] %s216
      %219 = dma.vmem_to_hbm [thread:$0]  %s215, 16, %s217, [#allocation7]
    $region25: #{tpu_custom_call.1} parent=1 // pred_fallthru
      _
    // Predicated region
    $region26: #{tpu_custom_call.1} parent=1 // pred_check
      _
    $region27: #{tpu_custom_call.1} parent=1 // pred_check_branch
      %221 = sbr.rel (0) target = $region29
    $region28: #{tpu_custom_call.1} parent=1 // pred_region
      %223 = dma.done [#allocation5], 16
    $region29: #{tpu_custom_call.1} parent=1 // pred_fallthru
      _
    // Predicated region
    $region30: #{tpu_custom_call.1} parent=1 // pred_check
      _
    $region31: #{tpu_custom_call.1} parent=1 // pred_check_branch
      %225 = sbr.rel (0) target = $region33
    $region32: #{tpu_custom_call.1} parent=1 // pred_region
      %227 = dma.done [#allocation7], 16
    $region33: #{tpu_custom_call.1} parent=1 // pred_fallthru
      _
    %228 = vsyncpa [#allocation5], 1
    %229 = vsyncpa [#allocation7], 1

</llo_original>
